<compile_context>
chip_gen: v6e
topology: v6e:2x2x1
jax: 0.10.0
libtpu: 0.0.40
codegen_flags: <defaults>
</compile_context>

<pallas_src>
import functools

import jax
import jax.numpy as jnp
from jax import lax
from jax.experimental import pallas as pl
from jax.experimental.pallas import tpu as pltpu

NUM_GROUPS = 32
EPS = 1e-5
LANE = 128
_HI = jax.lax.Precision.HIGHEST   # tiny stats dots + the pure-JAX reference only


def _round_up(x, m):
  return (x + m - 1) // m * m


# --------------------------- VMEM budget / tiling --------------------------- #

def _vmem_budget_bytes():
  """Generation-aware scoped-VMEM budget (leave runtime headroom below physical)."""
  cap = 64 << 20                      # conservative default (v7x physical per-TC VMEM)
  try:
    info = pltpu.get_tpu_info()
    for name in ("vmem_capacity_bytes", "vmem_bytes", "vmem_size_bytes"):
      v = getattr(info, name, None)
      if v:
        cap = int(v)
        break
  except Exception:                   # hardware query only; behaviour unchanged on failure
    pass
  # 128 MiB parts -> 112 MiB, 64 MiB parts -> 56 MiB.
  return int(cap - max(cap // 8, 8 << 20))


def _compute_step_bytes(tq, w, cin_p, cout_p, x_bytes, fuse):
  """Rough per-grid-step VMEM footprint of the GN+SiLU+conv kernel."""
  rows = tq * w
  rows_p = (tq + 4) * w
  blk_in = rows * cin_p * x_bytes + 2 * w * cin_p * x_bytes    # main tile + 2 halo rows
  blk_res = rows * cin_p * x_bytes                             # residual tile (worst case)
  blk_out = rows * cout_p * 4
  pads = 3 * rows_p * cin_p * 2                                # a / a_m / a_p (bf16)
  tmp = rows_p * cin_p * 4                                     # f32 pre-SiLU temporary
  fuse_buf = rows * 3 * cin_p * 2 if fuse else 0               # staged (rows, 3C) scratch
  acc = rows * cout_p * 4
  wts = 2 * 9 * cin_p * cout_p * 2                             # double-buffered bf16 weights
  return 2 * (blk_in + blk_res + blk_out) + pads + tmp + fuse_buf + acc + wts + (2 << 20)


def _pick_row_tile(h, w, cin_p, cout_p, x_bytes, fuse, budget):
  divs = [d for d in range(1, h + 1) if h % d == 0]
  fit = [d for d in divs
         if _compute_step_bytes(d, w, cin_p, cout_p, x_bytes, fuse) <= budget]
  if not fit:
    # TODO(synk): add a column-tile axis for planes too wide even at one row per tile.
    return 1
  # Prefer >= 2 tiles per image (v7x: both TensorCores get work even at B=1) and keep the
  # matmul M dim in the <= 1024-row sweet spot.
  cands = [d for d in fit if d < h] or fit
  sweet = [d for d in cands if d * w <= 1024]
  return max(sweet) if sweet else min(cands)


# ------------------------- GroupNorm sweep 1: stats -------------------------- #

def _gn_stats_kernel(x_ref, sums_ref):
  """Accumulate per-channel [sum, sum^2] over row tiles (MXU ones-vector dots)."""
  @pl.when(pl.program_id(1) == 0)
  def _():
    sums_ref[...] = jnp.zeros_like(sums_ref)
  x = x_ref[0].astype(jnp.float32)                        # (rows, C)
  ones = jnp.ones((1, x.shape[0]), jnp.float32)
  s = jnp.dot(ones, x, preferred_element_type=jnp.float32, precision=_HI)
  ss = jnp.dot(ones, x * x, preferred_element_type=jnp.float32, precision=_HI)
  sums_ref[0] = sums_ref[0] + jnp.concatenate([s, ss], axis=0)


def _gn_channel_sums(x_flat, tq, w, vmem_limit):
  b, hw, c_p = x_flat.shape
  h = hw // w
  t = h // tq
  rows = tq * w
  return pl.pallas_call(
      _gn_stats_kernel,
      out_shape=jax.ShapeDtypeStruct((b, 2, c_p), jnp.float32),
      grid_spec=pltpu.PrefetchScalarGridSpec(
          num_scalar_prefetch=0,
          grid=(b, t),
          in_specs=[pl.BlockSpec((1, rows, c_p), lambda bi, ti: (bi, ti, 0))],
          out_specs=pl.BlockSpec((1, 2, c_p), lambda bi, ti: (bi, 0, 0)),
      ),
      compiler_params=pltpu.CompilerParams(
          dimension_semantics=("parallel", "arbitrary"),
          vmem_limit_bytes=vmem_limit),
  )(x_flat)


def _gn_scale_shift(sums, c, c_p, gamma, beta, hw):
  """Tiny (B, C) finalize: group mean/rstd, gamma/beta folded into scale/shift."""
  g = NUM_GROUPS
  cpg = c // g
  n = float(hw * cpg)
  s = sums[:, 0, :c].reshape(-1, g, cpg).sum(axis=-1)     # (B, G)
  ss = sums[:, 1, :c].reshape(-1, g, cpg).sum(axis=-1)
  mean = s / n
  var = ss / n - mean * mean
  rstd = lax.rsqrt(var + EPS)
  mean_c = jnp.repeat(mean, cpg, axis=-1)                 # (B, C)
  rstd_c = jnp.repeat(rstd, cpg, axis=-1)
  scale = rstd_c * gamma[None, :]
  shift = beta[None, :] - mean_c * scale
  pad = c_p - c
  if pad:
    scale = jnp.pad(scale, ((0, 0), (0, pad)))
    shift = jnp.pad(shift, ((0, 0), (0, pad)))
  return jnp.stack([scale, shift], axis=1)                # (B, 2, C_p) f32


# ------------------- sweep 2: GN(scale/shift) -> SiLU -> conv ----------------- #

def _gn_silu_conv_kernel(*refs, tq, w, fuse, residual):
  """One (batch, row-tile) grid step of GroupNorm affine -> SiLU -> 3x3 conv (+residual)."""
  if fuse:
    row_scr = refs[-1]
    refs = refs[:-1]
  else:
    row_scr = None
  if residual == "conv":
    (ss_ref, xm_ref, xt_ref, xb_ref, w_ref, b_ref,
     xr_ref, wr_ref, br_ref, o_ref) = refs
  elif residual == "identity":
    (ss_ref, xm_ref, xt_ref, xb_ref, w_ref, b_ref, xr_ref, o_ref) = refs
    wr_ref = br_ref = None
  else:
    (ss_ref, xm_ref, xt_ref, xb_ref, w_ref, b_ref, o_ref) = refs
    xr_ref = wr_ref = br_ref = None

  ti = pl.program_id(1)
  rows = tq * w

  ss = ss_ref[0]                       # (2, Cin) f32: row 0 = scale, row 1 = shift
  scale = ss[0:1, :]
  shift = ss[1:2, :]

  def norm_silu(v):                    # GN affine + SiLU -> bf16 MXU operand
    y = v.astype(jnp.float32) * scale + shift
    return (y * jax.nn.sigmoid(y)).astype(jnp.bfloat16)

  # Halo rows gated to zero at the image top/bottom -> "same" zero padding in rows.
  gate_top = (1.0 - (ti == 0).astype(jnp.float32)).astype(jnp.bfloat16)
  gate_bot = (1.0 - (ti == pl.num_programs(1) - 1).astype(jnp.float32)).astype(jnp.bfloat16)
  top = norm_silu(xt_ref[0]) * gate_top                 # (W, Cin)
  bot = norm_silu(xb_ref[0]) * gate_bot                 # (W, Cin)
  mid = norm_silu(xm_ref[0])                            # (rows, Cin)
  cin = mid.shape[1]
  zrow = jnp.zeros((w, cin), jnp.bfloat16)
  # Zero-extended halo buffer: [zero row, top halo, tile, bottom halo, zero row].
  a = jnp.concatenate([zrow, top, mid, bot, zrow], axis=0)     # ((tq+4)*w, Cin)

  # Column ("same"-width) padding: two pre-zeroed edge-column variants replace 16 per-tap
  # masks.  dw=+1 taps read from a_p (col 0 zeroed), dw=-1 taps read from a_m (col W-1
  # zeroed); interior columns are untouched.
  col = lax.broadcasted_iota(jnp.int32, (a.shape[0], 1), 0) % w
  zero = jnp.zeros((), jnp.bfloat16)
  a_p = jnp.where(col == 0, zero, a)
  a_m = jnp.where(col == (w - 1), zero, a)

  def tap(src, off):                   # static row slice: no pltpu.roll / XLU traffic
    return lax.slice_in_dim(src, off, off + rows, axis=0)

  cout = w_ref.shape[-1]
  acc = jnp.zeros((rows, cout), jnp.float32)
  for kh in range(3):
    base = (kh + 1) * w
    if fuse:
      # Stage the (rows, 3*Cin) fused row through one reused VMEM scratch ref so only a
      # single copy is live across kh iterations (bounds temporary VMEM).
      row_scr[:, 0 * cin:1 * cin] = tap(a_m, base - 1)
      row_scr[:, 1 * cin:2 * cin] = tap(a, base)
      row_scr[:, 2 * cin:3 * cin] = tap(a_p, base + 1)
      acc = acc + jnp.dot(row_scr[...], w_ref[kh], preferred_element_type=jnp.float32)
    else:
      acc = acc + jnp.dot(tap(a_m, base - 1), w_ref[3 * kh + 0],
                          preferred_element_type=jnp.float32)
      acc = acc + jnp.dot(tap(a, base), w_ref[3 * kh + 1],
                          preferred_element_type=jnp.float32)
      acc = acc + jnp.dot(tap(a_p, base + 1), w_ref[3 * kh + 2],
                          preferred_element_type=jnp.float32)

  acc = acc + b_ref[...]

  if residual == "identity":
    acc = acc + xr_ref[0].astype(jnp.float32)           # exact f32 add of the raw x tile
  elif residual == "conv":
    acc = acc + jnp.dot(xr_ref[0].astype(jnp.bfloat16), wr_ref[...],
                        preferred_element_type=jnp.float32) + br_ref[...]

  o_ref[0] = acc.astype(o_ref.dtype)


def _gn_silu_conv(x_flat, ss, w_conv, b_conv, *, tq, w, fuse, out_dtype,
                  residual=None, x_res=None, w_res=None, b_res=None, vmem_limit=None):
  b, hw, cin_p = x_flat.shape
  h = hw // w
  t = h // tq
  rows = tq * w
  cout_p = w_conv.shape[-1]

  ss_spec = pl.BlockSpec((1, 2, cin_p), lambda bi, ti: (bi, 0, 0))
  main_spec = pl.BlockSpec((1, rows, cin_p), lambda bi, ti: (bi, ti, 0))
  # Halo rows: block size = one image row (W pixels); block index = image-row index,
  # clamped at the image top/bottom (those rows are gated to zero inside the kernel).
  top_spec = pl.BlockSpec((1, w, cin_p),
                          lambda bi, ti: (bi, jnp.maximum(ti * tq - 1, 0), 0))
  bot_spec = pl.BlockSpec((1, w, cin_p),
                          lambda bi, ti: (bi, jnp.minimum((ti + 1) * tq, h - 1), 0))
  w_spec = pl.BlockSpec(w_conv.shape, lambda bi, ti: (0, 0, 0))
  b_spec = pl.BlockSpec(b_conv.shape, lambda bi, ti: (0, 0))

  ops = [ss, x_flat, x_flat, x_flat, w_conv, b_conv]
  in_specs = [ss_spec, main_spec, top_spec, bot_spec, w_spec, b_spec]
  if residual is not None:
    ops.append(x_res)
    in_specs.append(pl.BlockSpec((1, rows, x_res.shape[-1]),
                                 lambda bi, ti: (bi, ti, 0)))
    if residual == "conv":
      ops += [w_res, b_res]
      in_specs += [pl.BlockSpec(w_res.shape, lambda bi, ti: (0, 0)),
                   pl.BlockSpec(b_res.shape, lambda bi, ti: (0, 0))]

  scratch = [pltpu.VMEM((rows, 3 * cin_p), jnp.bfloat16)] if fuse else []

  kern = functools.partial(_gn_silu_conv_kernel, tq=tq, w=w, fuse=fuse, residual=residual)

  return pl.pallas_call(
      kern,
      out_shape=jax.ShapeDtypeStruct((b, hw, cout_p), out_dtype),
      grid_spec=pltpu.PrefetchScalarGridSpec(
          num_scalar_prefetch=0,
          grid=(b, t),
          in_specs=in_specs,
          out_specs=pl.BlockSpec((1, rows, cout_p), lambda bi, ti: (bi, ti, 0)),
          scratch_shapes=scratch,
      ),
      compiler_params=pltpu.CompilerParams(
          dimension_semantics=("parallel", "parallel"),
          vmem_limit_bytes=vmem_limit),
  )(*ops)


# --------------------------------- wrapper ----------------------------------- #

def vae_residual_block(x, params, *, data_format="NCHW"):
  g1, bt1, w1, b1, g2, bt2, w2, b2, wr, br = params
  if data_format == "NCHW":
    b, cin, h, w = x.shape
    # TODO(synk): callers that already hold NHWC activations should pass
    # data_format="NHWC" (or fuse the producer transpose) to avoid this extra HBM trip.
    x_nhwc = jnp.transpose(x, (0, 2, 3, 1))
  elif data_format == "NHWC":
    b, h, w, cin = x.shape
    x_nhwc = x
  else:
    raise ValueError(f"unknown data_format {data_format}")

  cout = w1.shape[0]
  assert cin % NUM_GROUPS == 0 and cout % NUM_GROUPS == 0
  assert w % 8 == 0, "TODO(synk): support image width not a multiple of 8"

  hw = h * w
  cin_p = max(_round_up(cin, LANE), LANE)
  cout_p = max(_round_up(cout, LANE), LANE)

  x_flat = x_nhwc.reshape(b, hw, cin)
  if cin_p != cin:
    x_flat = jnp.pad(x_flat, ((0, 0), (0, 0), (0, cin_p - cin)))

  def conv_w(w_oihw, ci, co, ci_p, co_p, fuse):
    wt = jnp.transpose(w_oihw, (2, 3, 1, 0))                       # (3, 3, Ci, Co)
    wt = jnp.pad(wt, ((0, 0), (0, 0), (0, ci_p - ci), (0, co_p - co)))
    wt = wt.astype(jnp.bfloat16)
    return wt.reshape(3, 3 * ci_p, co_p) if fuse else wt.reshape(9, ci_p, co_p)

  def pad_vec(v, c, c_p):
    v = v.reshape(1, c).astype(jnp.float32)
    return jnp.pad(v, ((0, 0), (0, c_p - c))) if c_p != c else v

  # MXU-depth-aware kw-tap fusion: K=3C fused matmuls only when C < 256 (v6e/v7x MXU depth).
  fuse1 = cin_p < 256
  fuse2 = cout_p < 256

  budget = _vmem_budget_bytes()
  vmem_limit = int(budget)
  xb = jnp.dtype(x.dtype).itemsize
  tq1 = _pick_row_tile(h, w, cin_p, cout_p, xb, fuse1, budget)
  tq2 = _pick_row_tile(h, w, cout_p, cout_p, 4, fuse2, budget)

  w1p = conv_w(w1, cin, cout, cin_p, cout_p, fuse1)
  b1p = pad_vec(b1, cout, cout_p)
  w2p = conv_w(w2, cout, cout, cout_p, cout_p, fuse2)
  b2p = pad_vec(b2, cout, cout_p)

  # ---- GroupNorm 1 (two-sweep): per-channel sums in Pallas, tiny group finalize here.
  sums1 = _gn_channel_sums(x_flat, tq1, w, vmem_limit)
  ss1 = _gn_scale_shift(sums1, cin, cin_p,
                        g1.astype(jnp.float32), bt1.astype(jnp.float32), hw)

  # ---- GN1 -> SiLU -> conv1  (intermediate kept f32 for GN2 statistics accuracy).
  t1 = _gn_silu_conv(x_flat, ss1, w1p, b1p, tq=tq1, w=w, fuse=fuse1,
                     out_dtype=jnp.float32, residual=None, vmem_limit=vmem_limit)

  # ---- GroupNorm 2 (two-sweep) on the conv1 output.
  sums2 = _gn_channel_sums(t1, tq2, w, vmem_limit)
  ss2 = _gn_scale_shift(sums2, cout, cout_p,
                        g2.astype(jnp.float32), bt2.astype(jnp.float32), hw)

  # ---- GN2 -> SiLU -> conv2 -> + residual (identity or 1x1 conv of the original x tile).
  if cin == cout:
    residual, w_resp, b_resp = "identity", None, None
  else:
    residual = "conv"
    w_resp = jnp.pad(jnp.transpose(wr[:, :, 0, 0], (1, 0)),
                     ((0, cin_p - cin), (0, cout_p - cout))).astype(jnp.bfloat16)
    b_resp = pad_vec(br, cout, cout_p)

  out_flat = _gn_silu_conv(t1, ss2, w2p, b2p, tq=tq2, w=w, fuse=fuse2,
                           out_dtype=x.dtype, residual=residual,
                           x_res=x_flat, w_res=w_resp, b_res=b_resp,
                           vmem_limit=vmem_limit)

  out = out_flat[..., :cout].reshape(b, h, w, cout)
  if data_format == "NCHW":
    out = jnp.transpose(out, (0, 3, 1, 2))
  return out


# --------------------------- params & pure-JAX reference ---------------------- #

def init_params(key, cin, cout):
  ks = jax.random.split(key, 10)
  g1 = 1.0 + 0.1 * jax.random.normal(ks[0], (cin,), jnp.float32)
  bt1 = 0.1 * jax.random.normal(ks[1], (cin,), jnp.float32)
  w1 = jax.random.normal(ks[2], (cout, cin, 3, 3), jnp.float32) / jnp.sqrt(9.0 * cin)
  b1 = 0.1 * jax.random.normal(ks[3], (cout,), jnp.float32)
  g2 = 1.0 + 0.1 * jax.random.normal(ks[4], (cout,), jnp.float32)
  bt2 = 0.1 * jax.random.normal(ks[5], (cout,), jnp.float32)
  w2 = jax.random.normal(ks[6], (cout, cout, 3, 3), jnp.float32) / jnp.sqrt(9.0 * cout)
  b2 = 0.1 * jax.random.normal(ks[7], (cout,), jnp.float32)
  if cin == cout:   # nn.Identity() residual (kernel skips the 1x1 matmul entirely)
    wr = jnp.eye(cin, dtype=jnp.float32)[:, :, None, None]
    br = jnp.zeros((cout,), jnp.float32)
  else:             # 1x1 Conv2d residual branch
    wr = jax.random.normal(ks[8], (cout, cin, 1, 1), jnp.float32) / jnp.sqrt(float(cin))
    br = 0.1 * jax.random.normal(ks[9], (cout,), jnp.float32)
  return (g1, bt1, w1, b1, g2, bt2, w2, b2, wr, br)


def _ref_group_norm(x, gamma, beta, groups=NUM_GROUPS, eps=EPS):
  n, c, h, w = x.shape
  xg = x.reshape(n, groups, c // groups, h, w)
  mean = jnp.mean(xg, axis=(2, 3, 4), keepdims=True)
  var = jnp.mean((xg - mean) ** 2, axis=(2, 3, 4), keepdims=True)
  xn = ((xg - mean) / jnp.sqrt(var + eps)).reshape(n, c, h, w)
  return xn * gamma[None, :, None, None] + beta[None, :, None, None]


def _ref_conv(x, wt, bias, padding):
  out = lax.conv_general_dilated(x, wt, (1, 1), padding,
                                 dimension_numbers=("NCHW", "OIHW", "NCHW"),
                                 precision=_HI)
  return out + bias[None, :, None, None]


def ref_forward(x, params):
  g1, bt1, w1, b1, g2, bt2, w2, b2, wr, br = params
  t = _ref_group_norm(x, g1, bt1)
  t = t * jax.nn.sigmoid(t)
  t = _ref_conv(t, w1, b1, "SAME")
  t = _ref_group_norm(t, g2, bt2)
  t = t * jax.nn.sigmoid(t)
  t = _ref_conv(t, w2, b2, "SAME")
  res = _ref_conv(x, wr, br, "VALID")
  return t + res


# ----------------------------------- main ------------------------------------ #

if __name__ == "__main__":
  key = jax.random.PRNGKey(0)
  kx, k1, k2, k3 = jax.random.split(key, 4)
  B = 2
  # (identity residual, fused taps), (1x1-conv residual, fused), (identity, unfused C>=256)
  cases = [(64, 64, 8, 8, k1), (64, 128, 16, 16, k2), (256, 256, 8, 8, k3)]
  for cin, cout, H, W, kp in cases:
    x = jax.random.normal(kx, (B, cin, H, W), jnp.float32)
    params = init_params(kp, cin, cout)
    out = jax.block_until_ready(vae_residual_block(x, params))
    ref = ref_forward(x, params)
    assert out.shape == (B, cout, H, W)
    err = float(jnp.max(jnp.abs(out - ref)))
    scale = max(1.0, float(jnp.max(jnp.abs(ref))))
    # bf16 MXU operands with f32 accumulation: scale-relative tolerance.
    assert err < 5e-2 * scale, \
        f"({cin}->{cout}, {H}x{W}) max abs err too large: {err} (ref scale {scale})"
  print("KERNEL_OK")
</pallas_src>

<mosaic_0001>
module attributes {stable_mosaic.version = 11 : i64} {
  func.func @_gn_stats_kernel(%arg0: i32, %arg1: i32, %arg2: memref<1x32x128xf32, #tpu.memory_space<vmem>>, %arg3: memref<1x2x128xf32, #tpu.memory_space<vmem>>) attributes {dimension_semantics = [#tpu.dimension_semantics<parallel>, #tpu.dimension_semantics<arbitrary>], iteration_bounds = array<i64: 2, 2>, scalar_prefetch = 0 : i64, scratch_operands = 0 : i64, tpu.core_type = #tpu.core_type<tc>, window_params = [{transform_indices = @transform_0, window_bounds = array<i64: 1, 32, 128>}, {transform_indices = @transform_1, window_bounds = array<i64: 1, 2, 128>}]} {
    %c0_i32 = arith.constant 0 : i32
    %0 = arith.cmpi eq, %arg1, %c0_i32 : i32
    %1 = arith.extui %0 : i1 to i32
    %c0_i32_0 = arith.constant 0 : i32
    %2 = arith.cmpi ne, %1, %c0_i32_0 : i32
    scf.if %2 {
      %cst_11 = arith.constant 0.000000e+00 : f32
      %16 = vector.broadcast %cst_11 : f32 to vector<1x2x128xf32>
      %c0_12 = arith.constant 0 : index
      %c0_13 = arith.constant 0 : index
      %c0_14 = arith.constant 0 : index
      %17 = vector.load %arg3[%c0_12, %c0_13, %c0_14] : memref<1x2x128xf32, #tpu.memory_space<vmem>>, vector<1x2x128xf32>
      tpu.vector_store %arg3[%c0_12, %c0_13, %c0_14], %16 {strides = array<i32>} : memref<1x2x128xf32, #tpu.memory_space<vmem>>, vector<1x2x128xf32>,
    } else {
    }
    %c0 = arith.constant 0 : index
    %c0_1 = arith.constant 0 : index
    %c0_2 = arith.constant 0 : index
    %3 = vector.load %arg2[%c0, %c0_1, %c0_2] : memref<1x32x128xf32, #tpu.memory_space<vmem>>, vector<1x32x128xf32>
    %4 = vector.shape_cast %3 : vector<1x32x128xf32> to vector<32x128xf32>
    %cst = arith.constant 1.000000e+00 : f32
    %5 = vector.broadcast %cst : f32 to vector<1x32xf32>
    %cst_3 = arith.constant dense<0.000000e+00> : vector<1x128xf32>
    %6 = tpu.matmul %5, %4, %cst_3 {dimension_numbers = #tpu.dot_dimension_numbers<[1], [0], [0], [1], [0, 0, 1, 1], [], []>, precision = #tpu.contract_precision<fp32>} : vector<1x32xf32>, vector<32x128xf32>, vector<1x128xf32> -> vector<1x128xf32>
    %7 = arith.mulf %4, %4 : vector<32x128xf32>
    %cst_4 = arith.constant dense<0.000000e+00> : vector<1x128xf32>
    %8 = tpu.matmul %5, %7, %cst_4 {dimension_numbers = #tpu.dot_dimension_numbers<[1], [0], [0], [1], [0, 0, 1, 1], [], []>, precision = #tpu.contract_precision<fp32>} : vector<1x32xf32>, vector<32x128xf32>, vector<1x128xf32> -> vector<1x128xf32>
    %c0_5 = arith.constant 0 : index
    %c0_6 = arith.constant 0 : index
    %c0_7 = arith.constant 0 : index
    %9 = vector.load %arg3[%c0_5, %c0_6, %c0_7] : memref<1x2x128xf32, #tpu.memory_space<vmem>>, vector<1x2x128xf32>
    %10 = vector.shape_cast %9 : vector<1x2x128xf32> to vector<2x128xf32>
    %11 = tpu.concatenate %6, %8 in 0 : vector<1x128xf32>, vector<1x128xf32> -> vector<2x128xf32>
    %12 = arith.addf %10, %11 : vector<2x128xf32>
    %c0_8 = arith.constant 0 : index
    %c0_9 = arith.constant 0 : index
    %c0_10 = arith.constant 0 : index
    %13 = vector.load %arg3[%c0_8, %c0_9, %c0_10] : memref<1x2x128xf32, #tpu.memory_space<vmem>>, vector<1x2x128xf32>
    %14 = vector.shape_cast %13 : vector<1x2x128xf32> to vector<2x128xf32>
    %15 = vector.shape_cast %12 : vector<2x128xf32> to vector<1x2x128xf32>
    tpu.vector_store %arg3[%c0_8, %c0_9, %c0_10], %15 {strides = array<i32>} : memref<1x2x128xf32, #tpu.memory_space<vmem>>, vector<1x2x128xf32>,
    return
  }
  func.func @transform_0(%arg0: i32, %arg1: i32) -> (i32, i32, i32) {
    %c0_i32 = arith.constant 0 : i32
    %c0_i32_0 = arith.constant 0 : i32
    return %arg0, %arg1, %c0_i32 : i32, i32, i32
  }
  func.func @transform_1(%arg0: i32, %arg1: i32) -> (i32, i32, i32) {
    %c0_i32 = arith.constant 0 : i32
    %c0_i32_0 = arith.constant 0 : i32
    %c0_i32_1 = arith.constant 0 : i32
    return %arg0, %c0_i32, %c0_i32_0 : i32, i32, i32
  }
}

</mosaic_0001>

<llo_original>
// kernel: tpu_custom_call.1
$region0: #{tpu_custom_call.1}
  #allocation0 [shape = 'u32[]', space=smem, size = 0x4, offset = 0x4, fixed_abs, tag = 'smem constant byte address 0x4 - core index']
  #allocation1 [shape = 'u32[144,128]{1,0:T(1,128)}', space=vmem, size = 0x12000, scoped, tag = 'internal scratch']
  %s0 = inlined_call_operand.hbm [shape: f32[2,64,128], index: 0, kind: input, shape index: {}]
  %s1 = inlined_call_operand.hbm [shape: f32[2,2,128], index: 1, kind: output, shape index: {}]
  %s2 = sld [smem:[#allocation0]]
  $region45: #{tpu_custom_call.1} parent=0
    _
  %s4 = ssub.s32 1, %s2
  %s5 = scalar_select 0, %s4, %s2
  $region1: #{tpu_custom_call.1} parent=0
    #allocation2 [shape = 'u8[32768]{0}', space=vmem, size = 0x8000, scoped, tag = 'input window, operand 0']
    #allocation3 [shape = 's32[2]{0}', space=sflag, size = 0x8, scoped, tag = 'scoped memory for tpu_custom_call.1']
    #allocation4 [shape = 's32[2]{0}', space=sflag, size = 0x8, scoped, tag = 'scoped memory for tpu_custom_call.1']
    #allocation5 [shape = 'u8[2048]{0}', space=vmem, size = 0x800, scoped, tag = 'output window, operand 0']
    %6 = vsyncpa [#allocation3], 0
    %s7 = scalar_lea.sflag [#allocation3], 1
    %8 = vsyncpa %s7, 0
    %9 = vsyncpa [#allocation4], 0
    %s10 = scalar_lea.sflag [#allocation4], 1
    %11 = vsyncpa %s10, 0
    loop: start=0, step=1, limit=6
    $region2: #{tpu_custom_call.1} parent=1 // loop_pre_header
      _
    $region3: #{tpu_custom_call.1} parent=1 // loop_header
      %s13 = sphi 0, %s17
      %p14 = scmp.ge.s32.totalorder %s13, 6
      %s20 = sphi 0, %s32
      %s21 = sphi 0, %s28
      %s22 = sphi 0, %s20
      %s23 = sphi 0, %s21
      %s24 = sphi 0, %s22
      %s25 = sphi 0, %s23
      %s37 = sphi 0, %s39
      %s40 = sphi 0, %s37
      %s41 = sphi 0, %s40
      %s57 = sphi 0, %s41
      %s63 = sphi 0, %s65
      %s66 = sphi 0, %s63
      %s67 = sphi 0, %s66
      %s83 = sphi 0, %s67
    $region4: #{tpu_custom_call.1} parent=1 // loop_header_branch
      %16 = sbr.rel (%p14) target = $region8
    $region5: #{tpu_custom_call.1} parent=1 // loop_body
      %s18 = ssub.s32 %s13, 1
      %s19 = ssub.s32 %s13, 2
      %s26 = sadd.s32 1, %s21
      %p27 = scmp.ge.s32.totalorder %s26, 2
      %s28 = scalar_select %p27, 0, %s26
      %s29 = sadd.s32 1, %s20
      %s30 = scalar_select %p27, %s29, %s20
      %p31 = scmp.ge.s32.totalorder %s30, 2
      %s32 = scalar_select %p31, 0, %s30
      %s33 = ssub.s32 %s20, %s32
      %s34 = ssub.s32 %s21, %s28
      %s35 = sor.u32 %s33, %s34
      %p36 = scmp.eq.s32.totalorder %s35, 0
      %s38 = sadd.s32 %s37, 1
      %s39 = scalar_select %p36, %s37, %s38
      %p42 = pneg %p36
      %p43 = scmp.eq.s32.totalorder %s13, 3
      %p44 = por %p42, %p43
      %p45 = scmp.ne.s32.totalorder %s37, %s40
      %p46 = scmp.eq.s32.totalorder %s13, 0
      %p47 = por %p45, %p46
      %p48 = scmp.ne.s32.totalorder %s37, %s40
      %p49 = scmp.eq.s32.totalorder %s18, 3
      %p50 = por %p48, %p49
      %p51 = scmp.ne.s32.totalorder %s40, %s41
      %p52 = scmp.eq.s32.totalorder %s18, 0
      %p53 = por %p51, %p52
      %p54 = scmp.ne.s32.totalorder %s40, %s41
      %p55 = scmp.eq.s32.totalorder %s19, 3
      %p56 = por %p54, %p55
      %p58 = scmp.ne.s32.totalorder %s41, %s57
      %p59 = scmp.eq.s32.totalorder %s19, 0
      %p60 = por %p58, %p59
      %s61 = ssub.s32 %s20, %s32
      %p62 = scmp.eq.s32.totalorder %s61, 0
      %s64 = sadd.s32 %s63, 1
      %s65 = scalar_select %p62, %s63, %s64
      %p68 = pneg %p62
      %p69 = scmp.eq.s32.totalorder %s13, 3
      %p70 = por %p68, %p69
      %p71 = scmp.ne.s32.totalorder %s63, %s66
      %p72 = scmp.eq.s32.totalorder %s13, 0
      %p73 = por %p71, %p72
      %p74 = scmp.ne.s32.totalorder %s63, %s66
      %p75 = scmp.eq.s32.totalorder %s18, 3
      %p76 = por %p74, %p75
      %p77 = scmp.ne.s32.totalorder %s66, %s67
      %p78 = scmp.eq.s32.totalorder %s18, 0
      %p79 = por %p77, %p78
      %p80 = scmp.ne.s32.totalorder %s66, %s67
      %p81 = scmp.eq.s32.totalorder %s19, 3
      %p82 = por %p80, %p81
      %p84 = scmp.ne.s32.totalorder %s67, %s83
      %p85 = scmp.eq.s32.totalorder %s19, 0
      %p86 = por %p84, %p85
      %p87 = scmp.le.s32.totalorder 1, %s13
      %p88 = scmp.lt.s32.totalorder %s13, 5
      %p89 = pnand %p87, %p88
      %p90 = pneg %p89
      // Predicated region
      $region9: #{tpu_custom_call.1} parent=5 // pred_check
        _
      $region10: #{tpu_custom_call.1} parent=5 // pred_check_branch
        %92 = sbr.rel (%p89) target = $region12
      $region11: #{tpu_custom_call.1} parent=5 // pred_region
        %s93 = ssub.s32 %s13, 1
      $region12: #{tpu_custom_call.1} parent=5 // pred_fallthru
        _
      %p94 = scmp.lt.s32.totalorder %s13, 4
      // Predicated region
      $region13: #{tpu_custom_call.1} parent=5 // pred_check
        %p95 = pneg %p94
      $region14: #{tpu_custom_call.1} parent=5 // pred_check_branch
        %97 = sbr.rel (%p95) target = $region16
      $region15: #{tpu_custom_call.1} parent=5 // pred_region
        // Predicated region
        $region17: #{tpu_custom_call.1} parent=15 // pred_check
          %p98 = pneg %p47
        $region18: #{tpu_custom_call.1} parent=15 // pred_check_branch
          %100 = sbr.rel (%p98) target = $region20
        $region19: #{tpu_custom_call.1} parent=15 // pred_region
          %s101 = sand.u32 %s37, 1
          %s102 = scalar_lea.sflag [#allocation3], %s101
          %s103 = sand.u32 %s37, 1
          %s104 = smul.addr %s103, 32
          %s105 = scalar_lea.vmem [#allocation2], %s104
          %s106 = smul.u32 4, %s21
          %s108 = ssub.s32 512, 512
          %109 = vsyncadd %s102, %s108
          %s110 = smul.addr %s20, 8
          %s111 = sadd.s32 %s106, %s110
          %s112 = smul.addr %s111, 128
          %s113 = scalar_lea.hbm %s0, %s112
          %s114 = sshll.u32 %s105, 4
          %s115 = int_to_ptr.vmem [resolvable:$true] %s114
          %120 = dma.hbm_to_vmem [thread:$0]  %s113, 512, %s115, %s102, 128, 128, 8
        $region20: #{tpu_custom_call.1} parent=15 // pred_fallthru
          _
      $region16: #{tpu_custom_call.1} parent=5 // pred_fallthru
        _
      %p121 = scmp.le.s32.totalorder 1, %s13
      %p122 = scmp.lt.s32.totalorder %s13, 5
      %p123 = pnand %p121, %p122
      %p124 = pneg %p123
      // Predicated region
      $region21: #{tpu_custom_call.1} parent=5 // pred_check
        _
      $region22: #{tpu_custom_call.1} parent=5 // pred_check_branch
        %126 = sbr.rel (%p123) target = $region24
      $region23: #{tpu_custom_call.1} parent=5 // pred_region
        %s127 = ssub.s32 %s13, 1
        %s128 = sand.u32 %s40, 1
        %s129 = scalar_lea.sflag [#allocation3], %s128
        %s130 = sand.u32 %s40, 1
        %s131 = smul.addr %s130, 32
        %s132 = scalar_lea.vmem [#allocation2], %s131
        // Predicated region
        $region25: #{tpu_custom_call.1} parent=23 // pred_check
          %p133 = pneg %p53
        $region26: #{tpu_custom_call.1} parent=23 // pred_check_branch
          %135 = sbr.rel (%p133) target = $region28
        $region27: #{tpu_custom_call.1} parent=23 // pred_region
          %136 = dma.done %s129, 512
        $region28: #{tpu_custom_call.1} parent=23 // pred_fallthru
          _
        %s137 = sand.u32 %s40, 1
        %s138 = scalar_lea.sflag [#allocation3], %s137
        %s139 = sand.u32 %s40, 1
        %s140 = smul.addr %s139, 32
        %s141 = scalar_lea.vmem [#allocation2], %s140
        %p142 = pneg %p53
        %p143 = pneg %p50
        %p144 = pneg %p79
        %p145 = pneg %p76
        %s146 = sand.u32 %s66, 1
        %s147 = scalar_lea.sflag [#allocation4], %s146
        %s148 = sand.u32 %s66, 1
        %s149 = smul.addr %s148, 2
        %s150 = scalar_lea.vmem [#allocation5], %s149
        %s151 = smul.u32 4, %s23
        %p152 = scmp.eq.s32.totalorder %s23, 0
        // Predicated region
        $region29: #{tpu_custom_call.1} parent=23 // pred_check
          %p153 = pneg %p152
        $region30: #{tpu_custom_call.1} parent=23 // pred_check_branch
          %155 = sbr.rel (%p153) target = $region32
        $region31: #{tpu_custom_call.1} parent=23 // pred_region
          %156 = vst [vmem:[%s150] sm:$0x3] 0.0
        $region32: #{tpu_custom_call.1} parent=23 // pred_fallthru
          _
        %v157 = vld [vmem:[%s132] sm:$0xff]
        %v158 = vld [vmem:[%s132 + $0x8] sm:$0xff]
        %v159 = vld [vmem:[%s132 + $0x10] sm:$0xff]
        %v160 = vld [vmem:[%s132 + $0x18] sm:$0xff]
        %vm161 = vcmask 261120
        %v163 = vsel %vm161, 1.0, 0
        %165 = vmatprep.subr.mxu0 0.0
        %166 = vmatpush1.msra.mxu0 0.0
        %167 = vmatprep.subr.mxu0 0.0
        %168 = vmatpush1.msra.mxu0 0.0
        %169 = vmatprep.subr.mxu0 0.0
        %170 = vmatpush1.msra.mxu0 0.0
        %171 = vmatprep.subr.mxu0 0.0
        %172 = vmatpush1.msra.mxu0 0.0
        %173 = vmatprep.subr.mxu0 0.0
        %174 = vmatpush1.msra.mxu0 0.0
        %175 = vmatprep.subr.mxu0 0.0
        %176 = vmatpush1.msra.mxu0 0.0
        %177 = vmatprep.subr.mxu0 0.0
        %178 = vmatpush1.msra.mxu0 0.0
        %179 = vmatprep.subr.mxu0 0.0
        %180 = vmatpush1.msra.mxu0 0.0
        %181 = vmatprep.subr.mxu0 0.0
        %182 = vmatpush1.msra.mxu0 0.0
        %183 = vmatprep.subr.mxu0 0.0
        %184 = vmatpush1.msra.mxu0 0.0
        %185 = vmatprep.subr.mxu0 0.0
        %186 = vmatpush1.msra.mxu0 0.0
        %187 = vmatprep.subr.mxu0 0.0
        %188 = vmatpush1.msra.mxu0 0.0
        %189 = vmatprep.subr.mxu0 0.0
        %v190 = vand.u32 %v160, 4294901760
        %191 = vmatpush1.msra.mxu0 %v190
        %192 = vmatprep.subr.mxu0 0.0
        %v193 = vand.u32 %v159, 4294901760
        %194 = vmatpush1.msra.mxu0 %v193
        %195 = vmatprep.subr.mxu0 0.0
        %v196 = vand.u32 %v158, 4294901760
        %197 = vmatpush1.msra.mxu0 %v196
        %198 = vmatprep.subr.mxu0 0.0
        %v199 = vand.u32 %v157, 4294901760
        %200 = vmatpush1.msra.mxu0 %v199
        %201 = vmatprep.subr.mxu0 0.0
        %202 = vmatpush2.msra.mxu0 0.0
        %203 = vmatprep.subr.mxu0 0.0
        %204 = vmatpush2.msra.mxu0 0.0
        %205 = vmatprep.subr.mxu0 0.0
        %206 = vmatpush2.msra.mxu0 0.0
        %207 = vmatprep.subr.mxu0 0.0
        %208 = vmatpush2.msra.mxu0 0.0
        %209 = vmatprep.subr.mxu0 0.0
        %210 = vmatpush2.msra.mxu0 0.0
        %211 = vmatprep.subr.mxu0 0.0
        %212 = vmatpush2.msra.mxu0 0.0
        %213 = vmatprep.subr.mxu0 0.0
        %214 = vmatpush2.msra.mxu0 0.0
        %215 = vmatprep.subr.mxu0 0.0
        %216 = vmatpush2.msra.mxu0 0.0
        %217 = vmatprep.subr.mxu0 0.0
        %218 = vmatpush2.msra.mxu0 0.0
        %219 = vmatprep.subr.mxu0 0.0
        %220 = vmatpush2.msra.mxu0 0.0
        %221 = vmatprep.subr.mxu0 0.0
        %222 = vmatpush2.msra.mxu0 0.0
        %223 = vmatprep.subr.mxu0 0.0
        %224 = vmatpush2.msra.mxu0 0.0
        %225 = vmatprep.subr.mxu0 0.0
        %226 = vmatpush2.msra.mxu0 0.0
        %227 = vmatprep.subr.mxu0 0.0
        %228 = vmatpush2.msra.mxu0 0.0
        %229 = vmatprep.subr.mxu0 0.0
        %230 = vmatpush2.msra.mxu0 0.0
        %231 = vmatprep.subr.mxu0 0.0
        %232 = vmatpush2.msra.mxu0 0.0
        %233 = vmatprep.mubr.f32.mxu0 0.0
        %v234 = vand.u32 %v163, 4294901760
        %v235 = vsub.f32 %v163, %v234
        %v236 = vand.u32 %v235, 4294901760
        %v237 = vsub.f32 %v235, %v236
        %v238 = vand.u32 %v237, 4294901760
        %239 = vmatmul.mubr.f32.gmra.mxu0 %v238
        %v240 = vpop.f32.mrf.mxu0
        %v241 = vadd.f32 0.0, %v240
        %v242 = vpop.f32.mrf.mxu0
        %243 = vdwg.mxu0
        %244 = vmatprep.subr.mxu0 0.0
        %245 = vmatpush1.msra.mxu0 0.0
        %246 = vmatprep.subr.mxu0 0.0
        %247 = vmatpush1.msra.mxu0 0.0
        %248 = vmatprep.subr.mxu0 0.0
        %249 = vmatpush1.msra.mxu0 0.0
        %250 = vmatprep.subr.mxu0 0.0
        %251 = vmatpush1.msra.mxu0 0.0
        %252 = vmatprep.subr.mxu0 0.0
        %253 = vmatpush1.msra.mxu0 0.0
        %254 = vmatprep.subr.mxu0 0.0
        %255 = vmatpush1.msra.mxu0 0.0
        %256 = vmatprep.subr.mxu0 0.0
        %257 = vmatpush1.msra.mxu0 0.0
        %258 = vmatprep.subr.mxu0 0.0
        %259 = vmatpush1.msra.mxu0 0.0
        %260 = vmatprep.subr.mxu0 0.0
        %261 = vmatpush1.msra.mxu0 0.0
        %262 = vmatprep.subr.mxu0 0.0
        %263 = vmatpush1.msra.mxu0 0.0
        %264 = vmatprep.subr.mxu0 0.0
        %265 = vmatpush1.msra.mxu0 0.0
        %266 = vmatprep.subr.mxu0 0.0
        %267 = vmatpush1.msra.mxu0 0.0
        %268 = vmatprep.subr.mxu0 0.0
        %v269 = vand.u32 %v160, 4294901760
        %v270 = vsub.f32 %v160, %v269
        %v271 = vand.u32 %v270, 4294901760
        %v272 = vsub.f32 %v270, %v271
        %v273 = vand.u32 %v272, 4294901760
        %274 = vmatpush1.msra.mxu0 %v273
        %275 = vmatprep.subr.mxu0 0.0
        %v276 = vand.u32 %v159, 4294901760
        %v277 = vsub.f32 %v159, %v276
        %v278 = vand.u32 %v277, 4294901760
        %v279 = vsub.f32 %v277, %v278
        %v280 = vand.u32 %v279, 4294901760
        %281 = vmatpush1.msra.mxu0 %v280
        %282 = vmatprep.subr.mxu0 0.0
        %v283 = vand.u32 %v158, 4294901760
        %v284 = vsub.f32 %v158, %v283
        %v285 = vand.u32 %v284, 4294901760
        %v286 = vsub.f32 %v284, %v285
        %v287 = vand.u32 %v286, 4294901760
        %288 = vmatpush1.msra.mxu0 %v287
        %289 = vmatprep.subr.mxu0 0.0
        %v290 = vand.u32 %v157, 4294901760
        %v291 = vsub.f32 %v157, %v290
        %v292 = vand.u32 %v291, 4294901760
        %v293 = vsub.f32 %v291, %v292
        %v294 = vand.u32 %v293, 4294901760
        %295 = vmatpush1.msra.mxu0 %v294
        %296 = vmatprep.subr.mxu0 0.0
        %297 = vmatpush2.msra.mxu0 0.0
        %298 = vmatprep.subr.mxu0 0.0
        %299 = vmatpush2.msra.mxu0 0.0
        %300 = vmatprep.subr.mxu0 0.0
        %301 = vmatpush2.msra.mxu0 0.0
        %302 = vmatprep.subr.mxu0 0.0
        %303 = vmatpush2.msra.mxu0 0.0
        %304 = vmatprep.subr.mxu0 0.0
        %305 = vmatpush2.msra.mxu0 0.0
        %306 = vmatprep.subr.mxu0 0.0
        %307 = vmatpush2.msra.mxu0 0.0
        %308 = vmatprep.subr.mxu0 0.0
        %309 = vmatpush2.msra.mxu0 0.0
        %310 = vmatprep.subr.mxu0 0.0
        %311 = vmatpush2.msra.mxu0 0.0
        %312 = vmatprep.subr.mxu0 0.0
        %313 = vmatpush2.msra.mxu0 0.0
        %314 = vmatprep.subr.mxu0 0.0
        %315 = vmatpush2.msra.mxu0 0.0
        %316 = vmatprep.subr.mxu0 0.0
        %317 = vmatpush2.msra.mxu0 0.0
        %318 = vmatprep.subr.mxu0 0.0
        %319 = vmatpush2.msra.mxu0 0.0
        %320 = vmatprep.subr.mxu0 0.0
        %321 = vmatpush2.msra.mxu0 0.0
        %322 = vmatprep.subr.mxu0 0.0
        %323 = vmatpush2.msra.mxu0 0.0
        %324 = vmatprep.subr.mxu0 0.0
        %325 = vmatpush2.msra.mxu0 0.0
        %326 = vmatprep.subr.mxu0 0.0
        %327 = vmatpush2.msra.mxu0 0.0
        %328 = vmatprep.mubr.f32.mxu0 0.0
        %v329 = vand.u32 %v163, 4294901760
        %330 = vmatmul.mubr.f32.gmra.mxu0 %v329
        %v331 = vpop.f32.mrf.mxu0
        %v332 = vadd.f32 %v241, %v331
        %v333 = vpop.f32.mrf.mxu0
        %334 = vdwg.mxu0
        %335 = vmatprep.subr.mxu0 0.0
        %336 = vmatpush1.msra.mxu0 0.0
        %337 = vmatprep.subr.mxu0 0.0
        %338 = vmatpush1.msra.mxu0 0.0
        %339 = vmatprep.subr.mxu0 0.0
        %340 = vmatpush1.msra.mxu0 0.0
        %341 = vmatprep.subr.mxu0 0.0
        %342 = vmatpush1.msra.mxu0 0.0
        %343 = vmatprep.subr.mxu0 0.0
        %344 = vmatpush1.msra.mxu0 0.0
        %345 = vmatprep.subr.mxu0 0.0
        %346 = vmatpush1.msra.mxu0 0.0
        %347 = vmatprep.subr.mxu0 0.0
        %348 = vmatpush1.msra.mxu0 0.0
        %349 = vmatprep.subr.mxu0 0.0
        %350 = vmatpush1.msra.mxu0 0.0
        %351 = vmatprep.subr.mxu0 0.0
        %352 = vmatpush1.msra.mxu0 0.0
        %353 = vmatprep.subr.mxu0 0.0
        %354 = vmatpush1.msra.mxu0 0.0
        %355 = vmatprep.subr.mxu0 0.0
        %356 = vmatpush1.msra.mxu0 0.0
        %357 = vmatprep.subr.mxu0 0.0
        %358 = vmatpush1.msra.mxu0 0.0
        %359 = vmatprep.subr.mxu0 0.0
        %v360 = vand.u32 %v160, 4294901760
        %v361 = vsub.f32 %v160, %v360
        %362 = vmatpush1.msra.mxu0 %v361
        %363 = vmatprep.subr.mxu0 0.0
        %v364 = vand.u32 %v159, 4294901760
        %v365 = vsub.f32 %v159, %v364
        %366 = vmatpush1.msra.mxu0 %v365
        %367 = vmatprep.subr.mxu0 0.0
        %v368 = vand.u32 %v158, 4294901760
        %v369 = vsub.f32 %v158, %v368
        %370 = vmatpush1.msra.mxu0 %v369
        %371 = vmatprep.subr.mxu0 0.0
        %v372 = vand.u32 %v157, 4294901760
        %v373 = vsub.f32 %v157, %v372
        %374 = vmatpush1.msra.mxu0 %v373
        %375 = vmatprep.subr.mxu0 0.0
        %376 = vmatpush2.msra.mxu0 0.0
        %377 = vmatprep.subr.mxu0 0.0
        %378 = vmatpush2.msra.mxu0 0.0
        %379 = vmatprep.subr.mxu0 0.0
        %380 = vmatpush2.msra.mxu0 0.0
        %381 = vmatprep.subr.mxu0 0.0
        %382 = vmatpush2.msra.mxu0 0.0
        %383 = vmatprep.subr.mxu0 0.0
        %384 = vmatpush2.msra.mxu0 0.0
        %385 = vmatprep.subr.mxu0 0.0
        %386 = vmatpush2.msra.mxu0 0.0
        %387 = vmatprep.subr.mxu0 0.0
        %388 = vmatpush2.msra.mxu0 0.0
        %389 = vmatprep.subr.mxu0 0.0
        %390 = vmatpush2.msra.mxu0 0.0
        %391 = vmatprep.subr.mxu0 0.0
        %392 = vmatpush2.msra.mxu0 0.0
        %393 = vmatprep.subr.mxu0 0.0
        %394 = vmatpush2.msra.mxu0 0.0
        %395 = vmatprep.subr.mxu0 0.0
        %396 = vmatpush2.msra.mxu0 0.0
        %397 = vmatprep.subr.mxu0 0.0
        %398 = vmatpush2.msra.mxu0 0.0
        %399 = vmatprep.subr.mxu0 0.0
        %400 = vmatpush2.msra.mxu0 0.0
        %401 = vmatprep.subr.mxu0 0.0
        %402 = vmatpush2.msra.mxu0 0.0
        %403 = vmatprep.subr.mxu0 0.0
        %404 = vmatpush2.msra.mxu0 0.0
        %405 = vmatprep.subr.mxu0 0.0
        %406 = vmatpush2.msra.mxu0 0.0
        %407 = vmatprep.mubr.f32.mxu0 0.0
        %v408 = vand.u32 %v163, 4294901760
        %v409 = vsub.f32 %v163, %v408
        %410 = vmatmul.mubr.f32.gmra.mxu0 %v409
        %v411 = vpop.f32.mrf.mxu0
        %v412 = vadd.f32 %v332, %v411
        %v413 = vpop.f32.mrf.mxu0
        %414 = vdwg.mxu0
        %415 = vmatprep.subr.mxu0 0.0
        %416 = vmatpush1.msra.mxu0 0.0
        %417 = vmatprep.subr.mxu0 0.0
        %418 = vmatpush1.msra.mxu0 0.0
        %419 = vmatprep.subr.mxu0 0.0
        %420 = vmatpush1.msra.mxu0 0.0
        %421 = vmatprep.subr.mxu0 0.0
        %422 = vmatpush1.msra.mxu0 0.0
        %423 = vmatprep.subr.mxu0 0.0
        %424 = vmatpush1.msra.mxu0 0.0
        %425 = vmatprep.subr.mxu0 0.0
        %426 = vmatpush1.msra.mxu0 0.0
        %427 = vmatprep.subr.mxu0 0.0
        %428 = vmatpush1.msra.mxu0 0.0
        %429 = vmatprep.subr.mxu0 0.0
        %430 = vmatpush1.msra.mxu0 0.0
        %431 = vmatprep.subr.mxu0 0.0
        %432 = vmatpush1.msra.mxu0 0.0
        %433 = vmatprep.subr.mxu0 0.0
        %434 = vmatpush1.msra.mxu0 0.0
        %435 = vmatprep.subr.mxu0 0.0
        %436 = vmatpush1.msra.mxu0 0.0
        %437 = vmatprep.subr.mxu0 0.0
        %438 = vmatpush1.msra.mxu0 0.0
        %439 = vmatprep.subr.mxu0 0.0
        %v440 = vand.u32 %v160, 4294901760
        %441 = vmatpush1.msra.mxu0 %v440
        %442 = vmatprep.subr.mxu0 0.0
        %v443 = vand.u32 %v159, 4294901760
        %444 = vmatpush1.msra.mxu0 %v443
        %445 = vmatprep.subr.mxu0 0.0
        %v446 = vand.u32 %v158, 4294901760
        %447 = vmatpush1.msra.mxu0 %v446
        %448 = vmatprep.subr.mxu0 0.0
        %v449 = vand.u32 %v157, 4294901760
        %450 = vmatpush1.msra.mxu0 %v449
        %451 = vmatprep.subr.mxu0 0.0
        %452 = vmatpush2.msra.mxu0 0.0
        %453 = vmatprep.subr.mxu0 0.0
        %454 = vmatpush2.msra.mxu0 0.0
        %455 = vmatprep.subr.mxu0 0.0
        %456 = vmatpush2.msra.mxu0 0.0
        %457 = vmatprep.subr.mxu0 0.0
        %458 = vmatpush2.msra.mxu0 0.0
        %459 = vmatprep.subr.mxu0 0.0
        %460 = vmatpush2.msra.mxu0 0.0
        %461 = vmatprep.subr.mxu0 0.0
        %462 = vmatpush2.msra.mxu0 0.0
        %463 = vmatprep.subr.mxu0 0.0
        %464 = vmatpush2.msra.mxu0 0.0
        %465 = vmatprep.subr.mxu0 0.0
        %466 = vmatpush2.msra.mxu0 0.0
        %467 = vmatprep.subr.mxu0 0.0
        %468 = vmatpush2.msra.mxu0 0.0
        %469 = vmatprep.subr.mxu0 0.0
        %470 = vmatpush2.msra.mxu0 0.0
        %471 = vmatprep.subr.mxu0 0.0
        %472 = vmatpush2.msra.mxu0 0.0
        %473 = vmatprep.subr.mxu0 0.0
        %474 = vmatpush2.msra.mxu0 0.0
        %475 = vmatprep.subr.mxu0 0.0
        %476 = vmatpush2.msra.mxu0 0.0
        %477 = vmatprep.subr.mxu0 0.0
        %478 = vmatpush2.msra.mxu0 0.0
        %479 = vmatprep.subr.mxu0 0.0
        %480 = vmatpush2.msra.mxu0 0.0
        %481 = vmatprep.subr.mxu0 0.0
        %482 = vmatpush2.msra.mxu0 0.0
        %483 = vmatprep.mubr.f32.mxu0 0.0
        %v484 = vand.u32 %v163, 4294901760
        %v485 = vsub.f32 %v163, %v484
        %v486 = vand.u32 %v485, 4294901760
        %487 = vmatmul.mubr.f32.gmra.mxu0 %v486
        %v488 = vpop.f32.mrf.mxu0
        %v489 = vadd.f32 %v412, %v488
        %v490 = vpop.f32.mrf.mxu0
        %491 = vdwg.mxu0
        %492 = vmatprep.subr.mxu0 0.0
        %493 = vmatpush1.msra.mxu0 0.0
        %494 = vmatprep.subr.mxu0 0.0
        %495 = vmatpush1.msra.mxu0 0.0
        %496 = vmatprep.subr.mxu0 0.0
        %497 = vmatpush1.msra.mxu0 0.0
        %498 = vmatprep.subr.mxu0 0.0
        %499 = vmatpush1.msra.mxu0 0.0
        %500 = vmatprep.subr.mxu0 0.0
        %501 = vmatpush1.msra.mxu0 0.0
        %502 = vmatprep.subr.mxu0 0.0
        %503 = vmatpush1.msra.mxu0 0.0
        %504 = vmatprep.subr.mxu0 0.0
        %505 = vmatpush1.msra.mxu0 0.0
        %506 = vmatprep.subr.mxu0 0.0
        %507 = vmatpush1.msra.mxu0 0.0
        %508 = vmatprep.subr.mxu0 0.0
        %509 = vmatpush1.msra.mxu0 0.0
        %510 = vmatprep.subr.mxu0 0.0
        %511 = vmatpush1.msra.mxu0 0.0
        %512 = vmatprep.subr.mxu0 0.0
        %513 = vmatpush1.msra.mxu0 0.0
        %514 = vmatprep.subr.mxu0 0.0
        %515 = vmatpush1.msra.mxu0 0.0
        %516 = vmatprep.subr.mxu0 0.0
        %v517 = vand.u32 %v160, 4294901760
        %v518 = vsub.f32 %v160, %v517
        %v519 = vand.u32 %v518, 4294901760
        %520 = vmatpush1.msra.mxu0 %v519
        %521 = vmatprep.subr.mxu0 0.0
        %v522 = vand.u32 %v159, 4294901760
        %v523 = vsub.f32 %v159, %v522
        %v524 = vand.u32 %v523, 4294901760
        %525 = vmatpush1.msra.mxu0 %v524
        %526 = vmatprep.subr.mxu0 0.0
        %v527 = vand.u32 %v158, 4294901760
        %v528 = vsub.f32 %v158, %v527
        %v529 = vand.u32 %v528, 4294901760
        %530 = vmatpush1.msra.mxu0 %v529
        %531 = vmatprep.subr.mxu0 0.0
        %v532 = vand.u32 %v157, 4294901760
        %v533 = vsub.f32 %v157, %v532
        %v534 = vand.u32 %v533, 4294901760
        %535 = vmatpush1.msra.mxu0 %v534
        %536 = vmatprep.subr.mxu0 0.0
        %537 = vmatpush2.msra.mxu0 0.0
        %538 = vmatprep.subr.mxu0 0.0
        %539 = vmatpush2.msra.mxu0 0.0
        %540 = vmatprep.subr.mxu0 0.0
        %541 = vmatpush2.msra.mxu0 0.0
        %542 = vmatprep.subr.mxu0 0.0
        %543 = vmatpush2.msra.mxu0 0.0
        %544 = vmatprep.subr.mxu0 0.0
        %545 = vmatpush2.msra.mxu0 0.0
        %546 = vmatprep.subr.mxu0 0.0
        %547 = vmatpush2.msra.mxu0 0.0
        %548 = vmatprep.subr.mxu0 0.0
        %549 = vmatpush2.msra.mxu0 0.0
        %550 = vmatprep.subr.mxu0 0.0
        %551 = vmatpush2.msra.mxu0 0.0
        %552 = vmatprep.subr.mxu0 0.0
        %553 = vmatpush2.msra.mxu0 0.0
        %554 = vmatprep.subr.mxu0 0.0
        %555 = vmatpush2.msra.mxu0 0.0
        %556 = vmatprep.subr.mxu0 0.0
        %557 = vmatpush2.msra.mxu0 0.0
        %558 = vmatprep.subr.mxu0 0.0
        %559 = vmatpush2.msra.mxu0 0.0
        %560 = vmatprep.subr.mxu0 0.0
        %561 = vmatpush2.msra.mxu0 0.0
        %562 = vmatprep.subr.mxu0 0.0
        %563 = vmatpush2.msra.mxu0 0.0
        %564 = vmatprep.subr.mxu0 0.0
        %565 = vmatpush2.msra.mxu0 0.0
        %566 = vmatprep.subr.mxu0 0.0
        %567 = vmatpush2.msra.mxu0 0.0
        %568 = vmatprep.mubr.f32.mxu0 0.0
        %v569 = vand.u32 %v163, 4294901760
        %570 = vmatmul.mubr.f32.gmra.mxu0 %v569
        %v571 = vpop.f32.mrf.mxu0
        %v572 = vadd.f32 %v489, %v571
        %v573 = vpop.f32.mrf.mxu0
        %574 = vdwg.mxu0
        %575 = vmatprep.subr.mxu0 0.0
        %576 = vmatpush1.msra.mxu0 0.0
        %577 = vmatprep.subr.mxu0 0.0
        %578 = vmatpush1.msra.mxu0 0.0
        %579 = vmatprep.subr.mxu0 0.0
        %580 = vmatpush1.msra.mxu0 0.0
        %581 = vmatprep.subr.mxu0 0.0
        %582 = vmatpush1.msra.mxu0 0.0
        %583 = vmatprep.subr.mxu0 0.0
        %584 = vmatpush1.msra.mxu0 0.0
        %585 = vmatprep.subr.mxu0 0.0
        %586 = vmatpush1.msra.mxu0 0.0
        %587 = vmatprep.subr.mxu0 0.0
        %588 = vmatpush1.msra.mxu0 0.0
        %589 = vmatprep.subr.mxu0 0.0
        %590 = vmatpush1.msra.mxu0 0.0
        %591 = vmatprep.subr.mxu0 0.0
        %592 = vmatpush1.msra.mxu0 0.0
        %593 = vmatprep.subr.mxu0 0.0
        %594 = vmatpush1.msra.mxu0 0.0
        %595 = vmatprep.subr.mxu0 0.0
        %596 = vmatpush1.msra.mxu0 0.0
        %597 = vmatprep.subr.mxu0 0.0
        %598 = vmatpush1.msra.mxu0 0.0
        %599 = vmatprep.subr.mxu0 0.0
        %v600 = vand.u32 %v160, 4294901760
        %601 = vmatpush1.msra.mxu0 %v600
        %602 = vmatprep.subr.mxu0 0.0
        %v603 = vand.u32 %v159, 4294901760
        %604 = vmatpush1.msra.mxu0 %v603
        %605 = vmatprep.subr.mxu0 0.0
        %v606 = vand.u32 %v158, 4294901760
        %607 = vmatpush1.msra.mxu0 %v606
        %608 = vmatprep.subr.mxu0 0.0
        %v609 = vand.u32 %v157, 4294901760
        %610 = vmatpush1.msra.mxu0 %v609
        %611 = vmatprep.subr.mxu0 0.0
        %612 = vmatpush2.msra.mxu0 0.0
        %613 = vmatprep.subr.mxu0 0.0
        %614 = vmatpush2.msra.mxu0 0.0
        %615 = vmatprep.subr.mxu0 0.0
        %616 = vmatpush2.msra.mxu0 0.0
        %617 = vmatprep.subr.mxu0 0.0
        %618 = vmatpush2.msra.mxu0 0.0
        %619 = vmatprep.subr.mxu0 0.0
        %620 = vmatpush2.msra.mxu0 0.0
        %621 = vmatprep.subr.mxu0 0.0
        %622 = vmatpush2.msra.mxu0 0.0
        %623 = vmatprep.subr.mxu0 0.0
        %624 = vmatpush2.msra.mxu0 0.0
        %625 = vmatprep.subr.mxu0 0.0
        %626 = vmatpush2.msra.mxu0 0.0
        %627 = vmatprep.subr.mxu0 0.0
        %628 = vmatpush2.msra.mxu0 0.0
        %629 = vmatprep.subr.mxu0 0.0
        %630 = vmatpush2.msra.mxu0 0.0
        %631 = vmatprep.subr.mxu0 0.0
        %632 = vmatpush2.msra.mxu0 0.0
        %633 = vmatprep.subr.mxu0 0.0
        %634 = vmatpush2.msra.mxu0 0.0
        %635 = vmatprep.subr.mxu0 0.0
        %636 = vmatpush2.msra.mxu0 0.0
        %637 = vmatprep.subr.mxu0 0.0
        %638 = vmatpush2.msra.mxu0 0.0
        %639 = vmatprep.subr.mxu0 0.0
        %640 = vmatpush2.msra.mxu0 0.0
        %641 = vmatprep.subr.mxu0 0.0
        %642 = vmatpush2.msra.mxu0 0.0
        %643 = vmatprep.mubr.f32.mxu0 0.0
        %v644 = vand.u32 %v163, 4294901760
        %645 = vmatmul.mubr.f32.gmra.mxu0 %v644
        %v646 = vpop.f32.mrf.mxu0
        %v647 = vadd.f32 %v572, %v646
        %v648 = vpop.f32.mrf.mxu0
        %649 = vdwg.mxu0
        %v650 = vmul.f32 %v157, %v157
        %v651 = vmul.f32 %v158, %v158
        %v652 = vmul.f32 %v159, %v159
        %v653 = vmul.f32 %v160, %v160
        %654 = vmatprep.subr.mxu0 0.0
        %655 = vmatpush1.msra.mxu0 0.0
        %656 = vmatprep.subr.mxu0 0.0
        %657 = vmatpush1.msra.mxu0 0.0
        %658 = vmatprep.subr.mxu0 0.0
        %659 = vmatpush1.msra.mxu0 0.0
        %660 = vmatprep.subr.mxu0 0.0
        %661 = vmatpush1.msra.mxu0 0.0
        %662 = vmatprep.subr.mxu0 0.0
        %663 = vmatpush1.msra.mxu0 0.0
        %664 = vmatprep.subr.mxu0 0.0
        %665 = vmatpush1.msra.mxu0 0.0
        %666 = vmatprep.subr.mxu0 0.0
        %667 = vmatpush1.msra.mxu0 0.0
        %668 = vmatprep.subr.mxu0 0.0
        %669 = vmatpush1.msra.mxu0 0.0
        %670 = vmatprep.subr.mxu0 0.0
        %671 = vmatpush1.msra.mxu0 0.0
        %672 = vmatprep.subr.mxu0 0.0
        %673 = vmatpush1.msra.mxu0 0.0
        %674 = vmatprep.subr.mxu0 0.0
        %675 = vmatpush1.msra.mxu0 0.0
        %676 = vmatprep.subr.mxu0 0.0
        %677 = vmatpush1.msra.mxu0 0.0
        %678 = vmatprep.subr.mxu0 0.0
        %v679 = vand.u32 %v653, 4294901760
        %680 = vmatpush1.msra.mxu0 %v679
        %681 = vmatprep.subr.mxu0 0.0
        %v682 = vand.u32 %v652, 4294901760
        %683 = vmatpush1.msra.mxu0 %v682
        %684 = vmatprep.subr.mxu0 0.0
        %v685 = vand.u32 %v651, 4294901760
        %686 = vmatpush1.msra.mxu0 %v685
        %687 = vmatprep.subr.mxu0 0.0
        %v688 = vand.u32 %v650, 4294901760
        %689 = vmatpush1.msra.mxu0 %v688
        %690 = vmatprep.subr.mxu0 0.0
        %691 = vmatpush2.msra.mxu0 0.0
        %692 = vmatprep.subr.mxu0 0.0
        %693 = vmatpush2.msra.mxu0 0.0
        %694 = vmatprep.subr.mxu0 0.0
        %695 = vmatpush2.msra.mxu0 0.0
        %696 = vmatprep.subr.mxu0 0.0
        %697 = vmatpush2.msra.mxu0 0.0
        %698 = vmatprep.subr.mxu0 0.0
        %699 = vmatpush2.msra.mxu0 0.0
        %700 = vmatprep.subr.mxu0 0.0
        %701 = vmatpush2.msra.mxu0 0.0
        %702 = vmatprep.subr.mxu0 0.0
        %703 = vmatpush2.msra.mxu0 0.0
        %704 = vmatprep.subr.mxu0 0.0
        %705 = vmatpush2.msra.mxu0 0.0
        %706 = vmatprep.subr.mxu0 0.0
        %707 = vmatpush2.msra.mxu0 0.0
        %708 = vmatprep.subr.mxu0 0.0
        %709 = vmatpush2.msra.mxu0 0.0
        %710 = vmatprep.subr.mxu0 0.0
        %711 = vmatpush2.msra.mxu0 0.0
        %712 = vmatprep.subr.mxu0 0.0
        %713 = vmatpush2.msra.mxu0 0.0
        %714 = vmatprep.subr.mxu0 0.0
        %715 = vmatpush2.msra.mxu0 0.0
        %716 = vmatprep.subr.mxu0 0.0
        %717 = vmatpush2.msra.mxu0 0.0
        %718 = vmatprep.subr.mxu0 0.0
        %719 = vmatpush2.msra.mxu0 0.0
        %720 = vmatprep.subr.mxu0 0.0
        %721 = vmatpush2.msra.mxu0 0.0
        %722 = vmatprep.mubr.f32.mxu0 0.0
        %v723 = vand.u32 %v163, 4294901760
        %v724 = vsub.f32 %v163, %v723
        %v725 = vand.u32 %v724, 4294901760
        %v726 = vsub.f32 %v724, %v725
        %v727 = vand.u32 %v726, 4294901760
        %728 = vmatmul.mubr.f32.gmra.mxu0 %v727
        %v729 = vpop.f32.mrf.mxu0
        %v730 = vadd.f32 0.0, %v729
        %v731 = vpop.f32.mrf.mxu0
        %732 = vdwg.mxu0
        %733 = vmatprep.subr.mxu0 0.0
        %734 = vmatpush1.msra.mxu0 0.0
        %735 = vmatprep.subr.mxu0 0.0
        %736 = vmatpush1.msra.mxu0 0.0
        %737 = vmatprep.subr.mxu0 0.0
        %738 = vmatpush1.msra.mxu0 0.0
        %739 = vmatprep.subr.mxu0 0.0
        %740 = vmatpush1.msra.mxu0 0.0
        %741 = vmatprep.subr.mxu0 0.0
        %742 = vmatpush1.msra.mxu0 0.0
        %743 = vmatprep.subr.mxu0 0.0
        %744 = vmatpush1.msra.mxu0 0.0
        %745 = vmatprep.subr.mxu0 0.0
        %746 = vmatpush1.msra.mxu0 0.0
        %747 = vmatprep.subr.mxu0 0.0
        %748 = vmatpush1.msra.mxu0 0.0
        %749 = vmatprep.subr.mxu0 0.0
        %750 = vmatpush1.msra.mxu0 0.0
        %751 = vmatprep.subr.mxu0 0.0
        %752 = vmatpush1.msra.mxu0 0.0
        %753 = vmatprep.subr.mxu0 0.0
        %754 = vmatpush1.msra.mxu0 0.0
        %755 = vmatprep.subr.mxu0 0.0
        %756 = vmatpush1.msra.mxu0 0.0
        %757 = vmatprep.subr.mxu0 0.0
        %v758 = vand.u32 %v653, 4294901760
        %v759 = vsub.f32 %v653, %v758
        %v760 = vand.u32 %v759, 4294901760
        %v761 = vsub.f32 %v759, %v760
        %v762 = vand.u32 %v761, 4294901760
        %763 = vmatpush1.msra.mxu0 %v762
        %764 = vmatprep.subr.mxu0 0.0
        %v765 = vand.u32 %v652, 4294901760
        %v766 = vsub.f32 %v652, %v765
        %v767 = vand.u32 %v766, 4294901760
        %v768 = vsub.f32 %v766, %v767
        %v769 = vand.u32 %v768, 4294901760
        %770 = vmatpush1.msra.mxu0 %v769
        %771 = vmatprep.subr.mxu0 0.0
        %v772 = vand.u32 %v651, 4294901760
        %v773 = vsub.f32 %v651, %v772
        %v774 = vand.u32 %v773, 4294901760
        %v775 = vsub.f32 %v773, %v774
        %v776 = vand.u32 %v775, 4294901760
        %777 = vmatpush1.msra.mxu0 %v776
        %778 = vmatprep.subr.mxu0 0.0
        %v779 = vand.u32 %v650, 4294901760
        %v780 = vsub.f32 %v650, %v779
        %v781 = vand.u32 %v780, 4294901760
        %v782 = vsub.f32 %v780, %v781
        %v783 = vand.u32 %v782, 4294901760
        %784 = vmatpush1.msra.mxu0 %v783
        %785 = vmatprep.subr.mxu0 0.0
        %786 = vmatpush2.msra.mxu0 0.0
        %787 = vmatprep.subr.mxu0 0.0
        %788 = vmatpush2.msra.mxu0 0.0
        %789 = vmatprep.subr.mxu0 0.0
        %790 = vmatpush2.msra.mxu0 0.0
        %791 = vmatprep.subr.mxu0 0.0
        %792 = vmatpush2.msra.mxu0 0.0
        %793 = vmatprep.subr.mxu0 0.0
        %794 = vmatpush2.msra.mxu0 0.0
        %795 = vmatprep.subr.mxu0 0.0
        %796 = vmatpush2.msra.mxu0 0.0
        %797 = vmatprep.subr.mxu0 0.0
        %798 = vmatpush2.msra.mxu0 0.0
        %799 = vmatprep.subr.mxu0 0.0
        %800 = vmatpush2.msra.mxu0 0.0
        %801 = vmatprep.subr.mxu0 0.0
        %802 = vmatpush2.msra.mxu0 0.0
        %803 = vmatprep.subr.mxu0 0.0
        %804 = vmatpush2.msra.mxu0 0.0
        %805 = vmatprep.subr.mxu0 0.0
        %806 = vmatpush2.msra.mxu0 0.0
        %807 = vmatprep.subr.mxu0 0.0
        %808 = vmatpush2.msra.mxu0 0.0
        %809 = vmatprep.subr.mxu0 0.0
        %810 = vmatpush2.msra.mxu0 0.0
        %811 = vmatprep.subr.mxu0 0.0
        %812 = vmatpush2.msra.mxu0 0.0
        %813 = vmatprep.subr.mxu0 0.0
        %814 = vmatpush2.msra.mxu0 0.0
        %815 = vmatprep.subr.mxu0 0.0
        %816 = vmatpush2.msra.mxu0 0.0
        %817 = vmatprep.mubr.f32.mxu0 0.0
        %v818 = vand.u32 %v163, 4294901760
        %819 = vmatmul.mubr.f32.gmra.mxu0 %v818
        %v820 = vpop.f32.mrf.mxu0
        %v821 = vadd.f32 %v730, %v820
        %v822 = vpop.f32.mrf.mxu0
        %823 = vdwg.mxu0
        %824 = vmatprep.subr.mxu0 0.0
        %825 = vmatpush1.msra.mxu0 0.0
        %826 = vmatprep.subr.mxu0 0.0
        %827 = vmatpush1.msra.mxu0 0.0
        %828 = vmatprep.subr.mxu0 0.0
        %829 = vmatpush1.msra.mxu0 0.0
        %830 = vmatprep.subr.mxu0 0.0
        %831 = vmatpush1.msra.mxu0 0.0
        %832 = vmatprep.subr.mxu0 0.0
        %833 = vmatpush1.msra.mxu0 0.0
        %834 = vmatprep.subr.mxu0 0.0
        %835 = vmatpush1.msra.mxu0 0.0
        %836 = vmatprep.subr.mxu0 0.0
        %837 = vmatpush1.msra.mxu0 0.0
        %838 = vmatprep.subr.mxu0 0.0
        %839 = vmatpush1.msra.mxu0 0.0
        %840 = vmatprep.subr.mxu0 0.0
        %841 = vmatpush1.msra.mxu0 0.0
        %842 = vmatprep.subr.mxu0 0.0
        %843 = vmatpush1.msra.mxu0 0.0
        %844 = vmatprep.subr.mxu0 0.0
        %845 = vmatpush1.msra.mxu0 0.0
        %846 = vmatprep.subr.mxu0 0.0
        %847 = vmatpush1.msra.mxu0 0.0
        %848 = vmatprep.subr.mxu0 0.0
        %v849 = vand.u32 %v653, 4294901760
        %v850 = vsub.f32 %v653, %v849
        %851 = vmatpush1.msra.mxu0 %v850
        %852 = vmatprep.subr.mxu0 0.0
        %v853 = vand.u32 %v652, 4294901760
        %v854 = vsub.f32 %v652, %v853
        %855 = vmatpush1.msra.mxu0 %v854
        %856 = vmatprep.subr.mxu0 0.0
        %v857 = vand.u32 %v651, 4294901760
        %v858 = vsub.f32 %v651, %v857
        %859 = vmatpush1.msra.mxu0 %v858
        %860 = vmatprep.subr.mxu0 0.0
        %v861 = vand.u32 %v650, 4294901760
        %v862 = vsub.f32 %v650, %v861
        %863 = vmatpush1.msra.mxu0 %v862
        %864 = vmatprep.subr.mxu0 0.0
        %865 = vmatpush2.msra.mxu0 0.0
        %866 = vmatprep.subr.mxu0 0.0
        %867 = vmatpush2.msra.mxu0 0.0
        %868 = vmatprep.subr.mxu0 0.0
        %869 = vmatpush2.msra.mxu0 0.0
        %870 = vmatprep.subr.mxu0 0.0
        %871 = vmatpush2.msra.mxu0 0.0
        %872 = vmatprep.subr.mxu0 0.0
        %873 = vmatpush2.msra.mxu0 0.0
        %874 = vmatprep.subr.mxu0 0.0
        %875 = vmatpush2.msra.mxu0 0.0
        %876 = vmatprep.subr.mxu0 0.0
        %877 = vmatpush2.msra.mxu0 0.0
        %878 = vmatprep.subr.mxu0 0.0
        %879 = vmatpush2.msra.mxu0 0.0
        %880 = vmatprep.subr.mxu0 0.0
        %881 = vmatpush2.msra.mxu0 0.0
        %882 = vmatprep.subr.mxu0 0.0
        %883 = vmatpush2.msra.mxu0 0.0
        %884 = vmatprep.subr.mxu0 0.0
        %885 = vmatpush2.msra.mxu0 0.0
        %886 = vmatprep.subr.mxu0 0.0
        %887 = vmatpush2.msra.mxu0 0.0
        %888 = vmatprep.subr.mxu0 0.0
        %889 = vmatpush2.msra.mxu0 0.0
        %890 = vmatprep.subr.mxu0 0.0
        %891 = vmatpush2.msra.mxu0 0.0
        %892 = vmatprep.subr.mxu0 0.0
        %893 = vmatpush2.msra.mxu0 0.0
        %894 = vmatprep.subr.mxu0 0.0
        %895 = vmatpush2.msra.mxu0 0.0
        %896 = vmatprep.mubr.f32.mxu0 0.0
        %v897 = vand.u32 %v163, 4294901760
        %v898 = vsub.f32 %v163, %v897
        %899 = vmatmul.mubr.f32.gmra.mxu0 %v898
        %v900 = vpop.f32.mrf.mxu0
        %v901 = vadd.f32 %v821, %v900
        %v902 = vpop.f32.mrf.mxu0
        %903 = vdwg.mxu0
        %904 = vmatprep.subr.mxu0 0.0
        %905 = vmatpush1.msra.mxu0 0.0
        %906 = vmatprep.subr.mxu0 0.0
        %907 = vmatpush1.msra.mxu0 0.0
        %908 = vmatprep.subr.mxu0 0.0
        %909 = vmatpush1.msra.mxu0 0.0
        %910 = vmatprep.subr.mxu0 0.0
        %911 = vmatpush1.msra.mxu0 0.0
        %912 = vmatprep.subr.mxu0 0.0
        %913 = vmatpush1.msra.mxu0 0.0
        %914 = vmatprep.subr.mxu0 0.0
        %915 = vmatpush1.msra.mxu0 0.0
        %916 = vmatprep.subr.mxu0 0.0
        %917 = vmatpush1.msra.mxu0 0.0
        %918 = vmatprep.subr.mxu0 0.0
        %919 = vmatpush1.msra.mxu0 0.0
        %920 = vmatprep.subr.mxu0 0.0
        %921 = vmatpush1.msra.mxu0 0.0
        %922 = vmatprep.subr.mxu0 0.0
        %923 = vmatpush1.msra.mxu0 0.0
        %924 = vmatprep.subr.mxu0 0.0
        %925 = vmatpush1.msra.mxu0 0.0
        %926 = vmatprep.subr.mxu0 0.0
        %927 = vmatpush1.msra.mxu0 0.0
        %928 = vmatprep.subr.mxu0 0.0
        %v929 = vand.u32 %v653, 4294901760
        %930 = vmatpush1.msra.mxu0 %v929
        %931 = vmatprep.subr.mxu0 0.0
        %v932 = vand.u32 %v652, 4294901760
        %933 = vmatpush1.msra.mxu0 %v932
        %934 = vmatprep.subr.mxu0 0.0
        %v935 = vand.u32 %v651, 4294901760
        %936 = vmatpush1.msra.mxu0 %v935
        %937 = vmatprep.subr.mxu0 0.0
        %v938 = vand.u32 %v650, 4294901760
        %939 = vmatpush1.msra.mxu0 %v938
        %940 = vmatprep.subr.mxu0 0.0
        %941 = vmatpush2.msra.mxu0 0.0
        %942 = vmatprep.subr.mxu0 0.0
        %943 = vmatpush2.msra.mxu0 0.0
        %944 = vmatprep.subr.mxu0 0.0
        %945 = vmatpush2.msra.mxu0 0.0
        %946 = vmatprep.subr.mxu0 0.0
        %947 = vmatpush2.msra.mxu0 0.0
        %948 = vmatprep.subr.mxu0 0.0
        %949 = vmatpush2.msra.mxu0 0.0
        %950 = vmatprep.subr.mxu0 0.0
        %951 = vmatpush2.msra.mxu0 0.0
        %952 = vmatprep.subr.mxu0 0.0
        %953 = vmatpush2.msra.mxu0 0.0
        %954 = vmatprep.subr.mxu0 0.0
        %955 = vmatpush2.msra.mxu0 0.0
        %956 = vmatprep.subr.mxu0 0.0
        %957 = vmatpush2.msra.mxu0 0.0
        %958 = vmatprep.subr.mxu0 0.0
        %959 = vmatpush2.msra.mxu0 0.0
        %960 = vmatprep.subr.mxu0 0.0
        %961 = vmatpush2.msra.mxu0 0.0
        %962 = vmatprep.subr.mxu0 0.0
        %963 = vmatpush2.msra.mxu0 0.0
        %964 = vmatprep.subr.mxu0 0.0
        %965 = vmatpush2.msra.mxu0 0.0
        %966 = vmatprep.subr.mxu0 0.0
        %967 = vmatpush2.msra.mxu0 0.0
        %968 = vmatprep.subr.mxu0 0.0
        %969 = vmatpush2.msra.mxu0 0.0
        %970 = vmatprep.subr.mxu0 0.0
        %971 = vmatpush2.msra.mxu0 0.0
        %972 = vmatprep.mubr.f32.mxu0 0.0
        %v973 = vand.u32 %v163, 4294901760
        %v974 = vsub.f32 %v163, %v973
        %v975 = vand.u32 %v974, 4294901760
        %976 = vmatmul.mubr.f32.gmra.mxu0 %v975
        %v977 = vpop.f32.mrf.mxu0
        %v978 = vadd.f32 %v901, %v977
        %v979 = vpop.f32.mrf.mxu0
        %980 = vdwg.mxu0
        %981 = vmatprep.subr.mxu0 0.0
        %982 = vmatpush1.msra.mxu0 0.0
        %983 = vmatprep.subr.mxu0 0.0
        %984 = vmatpush1.msra.mxu0 0.0
        %985 = vmatprep.subr.mxu0 0.0
        %986 = vmatpush1.msra.mxu0 0.0
        %987 = vmatprep.subr.mxu0 0.0
        %988 = vmatpush1.msra.mxu0 0.0
        %989 = vmatprep.subr.mxu0 0.0
        %990 = vmatpush1.msra.mxu0 0.0
        %991 = vmatprep.subr.mxu0 0.0
        %992 = vmatpush1.msra.mxu0 0.0
        %993 = vmatprep.subr.mxu0 0.0
        %994 = vmatpush1.msra.mxu0 0.0
        %995 = vmatprep.subr.mxu0 0.0
        %996 = vmatpush1.msra.mxu0 0.0
        %997 = vmatprep.subr.mxu0 0.0
        %998 = vmatpush1.msra.mxu0 0.0
        %999 = vmatprep.subr.mxu0 0.0
        %1000 = vmatpush1.msra.mxu0 0.0
        %1001 = vmatprep.subr.mxu0 0.0
        %1002 = vmatpush1.msra.mxu0 0.0
        %1003 = vmatprep.subr.mxu0 0.0
        %1004 = vmatpush1.msra.mxu0 0.0
        %1005 = vmatprep.subr.mxu0 0.0
        %v1006 = vand.u32 %v653, 4294901760
        %v1007 = vsub.f32 %v653, %v1006
        %v1008 = vand.u32 %v1007, 4294901760
        %1009 = vmatpush1.msra.mxu0 %v1008
        %1010 = vmatprep.subr.mxu0 0.0
        %v1011 = vand.u32 %v652, 4294901760
        %v1012 = vsub.f32 %v652, %v1011
        %v1013 = vand.u32 %v1012, 4294901760
        %1014 = vmatpush1.msra.mxu0 %v1013
        %1015 = vmatprep.subr.mxu0 0.0
        %v1016 = vand.u32 %v651, 4294901760
        %v1017 = vsub.f32 %v651, %v1016
        %v1018 = vand.u32 %v1017, 4294901760
        %1019 = vmatpush1.msra.mxu0 %v1018
        %1020 = vmatprep.subr.mxu0 0.0
        %v1021 = vand.u32 %v650, 4294901760
        %v1022 = vsub.f32 %v650, %v1021
        %v1023 = vand.u32 %v1022, 4294901760
        %1024 = vmatpush1.msra.mxu0 %v1023
        %1025 = vmatprep.subr.mxu0 0.0
        %1026 = vmatpush2.msra.mxu0 0.0
        %1027 = vmatprep.subr.mxu0 0.0
        %1028 = vmatpush2.msra.mxu0 0.0
        %1029 = vmatprep.subr.mxu0 0.0
        %1030 = vmatpush2.msra.mxu0 0.0
        %1031 = vmatprep.subr.mxu0 0.0
        %1032 = vmatpush2.msra.mxu0 0.0
        %1033 = vmatprep.subr.mxu0 0.0
        %1034 = vmatpush2.msra.mxu0 0.0
        %1035 = vmatprep.subr.mxu0 0.0
        %1036 = vmatpush2.msra.mxu0 0.0
        %1037 = vmatprep.subr.mxu0 0.0
        %1038 = vmatpush2.msra.mxu0 0.0
        %1039 = vmatprep.subr.mxu0 0.0
        %1040 = vmatpush2.msra.mxu0 0.0
        %1041 = vmatprep.subr.mxu0 0.0
        %1042 = vmatpush2.msra.mxu0 0.0
        %1043 = vmatprep.subr.mxu0 0.0
        %1044 = vmatpush2.msra.mxu0 0.0
        %1045 = vmatprep.subr.mxu0 0.0
        %1046 = vmatpush2.msra.mxu0 0.0
        %1047 = vmatprep.subr.mxu0 0.0
        %1048 = vmatpush2.msra.mxu0 0.0
        %1049 = vmatprep.subr.mxu0 0.0
        %1050 = vmatpush2.msra.mxu0 0.0
        %1051 = vmatprep.subr.mxu0 0.0
        %1052 = vmatpush2.msra.mxu0 0.0
        %1053 = vmatprep.subr.mxu0 0.0
        %1054 = vmatpush2.msra.mxu0 0.0
        %1055 = vmatprep.subr.mxu0 0.0
        %1056 = vmatpush2.msra.mxu0 0.0
        %1057 = vmatprep.mubr.f32.mxu0 0.0
        %v1058 = vand.u32 %v163, 4294901760
        %1059 = vmatmul.mubr.f32.gmra.mxu0 %v1058
        %v1060 = vpop.f32.mrf.mxu0
        %v1061 = vadd.f32 %v978, %v1060
        %v1062 = vpop.f32.mrf.mxu0
        %1063 = vdwg.mxu0
        %1064 = vmatprep.subr.mxu0 0.0
        %1065 = vmatpush1.msra.mxu0 0.0
        %1066 = vmatprep.subr.mxu0 0.0
        %1067 = vmatpush1.msra.mxu0 0.0
        %1068 = vmatprep.subr.mxu0 0.0
        %1069 = vmatpush1.msra.mxu0 0.0
        %1070 = vmatprep.subr.mxu0 0.0
        %1071 = vmatpush1.msra.mxu0 0.0
        %1072 = vmatprep.subr.mxu0 0.0
        %1073 = vmatpush1.msra.mxu0 0.0
        %1074 = vmatprep.subr.mxu0 0.0
        %1075 = vmatpush1.msra.mxu0 0.0
        %1076 = vmatprep.subr.mxu0 0.0
        %1077 = vmatpush1.msra.mxu0 0.0
        %1078 = vmatprep.subr.mxu0 0.0
        %1079 = vmatpush1.msra.mxu0 0.0
        %1080 = vmatprep.subr.mxu0 0.0
        %1081 = vmatpush1.msra.mxu0 0.0
        %1082 = vmatprep.subr.mxu0 0.0
        %1083 = vmatpush1.msra.mxu0 0.0
        %1084 = vmatprep.subr.mxu0 0.0
        %1085 = vmatpush1.msra.mxu0 0.0
        %1086 = vmatprep.subr.mxu0 0.0
        %1087 = vmatpush1.msra.mxu0 0.0
        %1088 = vmatprep.subr.mxu0 0.0
        %v1089 = vand.u32 %v653, 4294901760
        %1090 = vmatpush1.msra.mxu0 %v1089
        %1091 = vmatprep.subr.mxu0 0.0
        %v1092 = vand.u32 %v652, 4294901760
        %1093 = vmatpush1.msra.mxu0 %v1092
        %1094 = vmatprep.subr.mxu0 0.0
        %v1095 = vand.u32 %v651, 4294901760
        %1096 = vmatpush1.msra.mxu0 %v1095
        %1097 = vmatprep.subr.mxu0 0.0
        %v1098 = vand.u32 %v650, 4294901760
        %1099 = vmatpush1.msra.mxu0 %v1098
        %1100 = vmatprep.subr.mxu0 0.0
        %1101 = vmatpush2.msra.mxu0 0.0
        %1102 = vmatprep.subr.mxu0 0.0
        %1103 = vmatpush2.msra.mxu0 0.0
        %1104 = vmatprep.subr.mxu0 0.0
        %1105 = vmatpush2.msra.mxu0 0.0
        %1106 = vmatprep.subr.mxu0 0.0
        %1107 = vmatpush2.msra.mxu0 0.0
        %1108 = vmatprep.subr.mxu0 0.0
        %1109 = vmatpush2.msra.mxu0 0.0
        %1110 = vmatprep.subr.mxu0 0.0
        %1111 = vmatpush2.msra.mxu0 0.0
        %1112 = vmatprep.subr.mxu0 0.0
        %1113 = vmatpush2.msra.mxu0 0.0
        %1114 = vmatprep.subr.mxu0 0.0
        %1115 = vmatpush2.msra.mxu0 0.0
        %1116 = vmatprep.subr.mxu0 0.0
        %1117 = vmatpush2.msra.mxu0 0.0
        %1118 = vmatprep.subr.mxu0 0.0
        %1119 = vmatpush2.msra.mxu0 0.0
        %1120 = vmatprep.subr.mxu0 0.0
        %1121 = vmatpush2.msra.mxu0 0.0
        %1122 = vmatprep.subr.mxu0 0.0
        %1123 = vmatpush2.msra.mxu0 0.0
        %1124 = vmatprep.subr.mxu0 0.0
        %1125 = vmatpush2.msra.mxu0 0.0
        %1126 = vmatprep.subr.mxu0 0.0
        %1127 = vmatpush2.msra.mxu0 0.0
        %1128 = vmatprep.subr.mxu0 0.0
        %1129 = vmatpush2.msra.mxu0 0.0
        %1130 = vmatprep.subr.mxu0 0.0
        %1131 = vmatpush2.msra.mxu0 0.0
        %1132 = vmatprep.mubr.f32.mxu0 0.0
        %v1133 = vand.u32 %v163, 4294901760
        %1134 = vmatmul.mubr.f32.gmra.mxu0 %v1133
        %v1135 = vpop.f32.mrf.mxu0
        %v1136 = vadd.f32 %v1061, %v1135
        %v1137 = vpop.f32.mrf.mxu0
        %1138 = vdwg.mxu0
        %v1139 = vld [vmem:[%s150] sm:$0x3]
        %v1141 = vrot.slane %v1136, 7
        %vm1143 = vcmask 1040384
        %v1144 = vsel %vm1143, %v647, %v1141
        %v1145 = vadd.f32 %v1139, %v1144
        %1146 = vst [vmem:[%s150] sm:$0x3] %v1145
        %s1147 = sand.u32 %s66, 1
        %s1148 = scalar_lea.sflag [#allocation4], %s1147
        %s1149 = sand.u32 %s66, 1
        %s1150 = smul.addr %s1149, 2
        %s1151 = scalar_lea.vmem [#allocation5], %s1150
        // Predicated region
        $region33: #{tpu_custom_call.1} parent=23 // pred_check
          %p1152 = pneg %p76
        $region34: #{tpu_custom_call.1} parent=23 // pred_check_branch
          %1154 = sbr.rel (%p1152) target = $region36
        $region35: #{tpu_custom_call.1} parent=23 // pred_region
          %s1156 = ssub.s32 32, 32
          %1157 = vsyncadd %s1148, %s1156
          %s1158 = smul.addr %s22, 32
          %s1159 = scalar_lea.hbm %s1, %s1158
          %s1161 = sshll.u32 %s1151, 4
          %s1162 = int_to_ptr.vmem [resolvable:$true] %s1161
          %1164 = dma.vmem_to_hbm [thread:$0]  %s1162, 32, %s1159, %s1148
        $region36: #{tpu_custom_call.1} parent=23 // pred_fallthru
          _
      $region24: #{tpu_custom_call.1} parent=5 // pred_fallthru
        _
      %p1165 = scmp.le.s32.totalorder 2, %s13
      // Predicated region
      $region37: #{tpu_custom_call.1} parent=5 // pred_check
        %p1166 = pneg %p1165
      $region38: #{tpu_custom_call.1} parent=5 // pred_check_branch
        %1168 = sbr.rel (%p1166) target = $region40
      $region39: #{tpu_custom_call.1} parent=5 // pred_region
        %s1169 = ssub.s32 %s13, 2
        // Predicated region
        $region41: #{tpu_custom_call.1} parent=39 // pred_check
          %p1170 = pneg %p82
        $region42: #{tpu_custom_call.1} parent=39 // pred_check_branch
          %1172 = sbr.rel (%p1170) target = $region44
        $region43: #{tpu_custom_call.1} parent=39 // pred_region
          %s1173 = sand.u32 %s67, 1
          %s1174 = scalar_lea.sflag [#allocation4], %s1173
          %s1175 = sand.u32 %s67, 1
          %s1176 = smul.addr %s1175, 2
          %s1177 = scalar_lea.vmem [#allocation5], %s1176
          %1178 = dma.done %s1174, 32
        $region44: #{tpu_custom_call.1} parent=39 // pred_fallthru
          _
      $region40: #{tpu_custom_call.1} parent=5 // pred_fallthru
        _
    $region6: #{tpu_custom_call.1} parent=1 // loop_footer
      %s17 = sadd.s32 1, %s13
    $region7: #{tpu_custom_call.1} parent=1 // loop_footer_branch
      %12 = sbr.rel target = $region3
    $region8: #{tpu_custom_call.1} parent=1 // loop_exit
      _
    %1179 = vsyncpa [#allocation3], 1
    %s1180 = scalar_lea.sflag [#allocation3], 1
    %1181 = vsyncpa %s1180, 1
    %1182 = vsyncpa [#allocation4], 1
    %s1183 = scalar_lea.sflag [#allocation4], 1
    %1184 = vsyncpa %s1183, 1

</llo_original>
